<compile_context>
chip_gen: v6e
topology: v6e:2x2x1
jax: 0.10.0
libtpu: 0.0.40
codegen_flags: <defaults>
</compile_context>

<pallas_src>
import math

import jax
import jax.numpy as jnp
from jax.experimental import pallas as pl
from jax.experimental.pallas import tpu as pltpu


# --------------------------------------------------------------------------- #
# Kernel
# --------------------------------------------------------------------------- #
def spr_kernel(x_ref, pool_ref, w1_ref, b1_ref, w2_ref, b2_ref, o_ref):
    # x_ref   : (TB*C, H*W)  TB whole images, rows ordered (image, channel)
    # pool_ref: (H*W, 5)     pooling weights [global | TL | TR | BL | BR], x dtype
    # w1_ref  : (5, C, hidden) fc1 weight slabs (one per pooled feature), f32
    # b1_ref  : (1, hidden)  f32
    # w2_ref  : (hidden, C)  f32
    # b2_ref  : (1, C)       f32
    # o_ref   : (TB, 1, C)   sigmoid attention weights
    tb = o_ref.shape[0]
    c = o_ref.shape[2]

    # One MXU pass over the whole block: all five pooled means at once, f32 acc.
    pooled = jnp.dot(x_ref[...], pool_ref[...],
                     preferred_element_type=jnp.float32)          # (TB*C, 5)
    feat = pooled.reshape(tb, c, 5)                               # leading-dim split

    # fc1 as five tiny matmuls against per-feature weight slabs (no lane concat).
    sel = jax.lax.broadcasted_iota(jnp.int32, (1, 1, 5), 2)
    h = b1_ref[...]                                               # (1, hidden)
    for k in range(5):
        fk = jnp.sum(jnp.where(sel == k, feat, 0.0), axis=-1)     # (TB, C)
        h = h + jnp.dot(fk, w1_ref[k], preferred_element_type=jnp.float32)
    h = jnp.maximum(h, 0.0)                                       # ReLU
    y = jnp.dot(h, w2_ref[...], preferred_element_type=jnp.float32) + b2_ref[...]
    o_ref[:, 0, :] = jax.nn.sigmoid(y).astype(o_ref.dtype)


# --------------------------------------------------------------------------- #
# Wrapper helpers
# --------------------------------------------------------------------------- #
def _tpu_params():
    """Generation-aware VMEM limit, x-block budget, and TensorCore count."""
    try:
        kind = jax.devices()[0].device_kind.lower()
    except Exception:
        kind = ""
    big_vmem = any(t in kind for t in ("v4", "v5", "v6"))   # 128 MiB VMEM parts
    two_tc = any(t in kind for t in ("v7", "v4"))           # 2 TensorCores / chip
    vmem_limit = (96 if big_vmem else 40) * 1024 * 1024     # conservative if unknown
    x_budget = (56 if big_vmem else 20) * 1024 * 1024
    try:  # refine from the hardware query when available
        cap = getattr(pltpu.get_tpu_info(), "vmem_capacity_bytes", None)
        if cap:
            vmem_limit = min(vmem_limit, int(cap * 0.65))
            x_budget = min(x_budget, int(cap * 0.40))
    except Exception:
        pass
    return vmem_limit, x_budget, (2 if two_tc else 1)


def _choose_batch_tile(B, C, HW, itemsize, x_budget_bytes, num_tc):
    """Largest TB whose double-buffered x block (+ ~1 block of in-kernel staging
    headroom) fits the budget.  Only multi-TensorCore chips keep >= num_tc grid
    steps (the old unconditional halving hurt v5e/v6e)."""
    per_img = C * HW * itemsize
    tb = max(1, x_budget_bytes // (3 * per_img))       # 2x double buffer + 1x headroom
    if num_tc > 1 and B >= 2:
        tb = min(tb, max(1, -(-B // num_tc)))          # work for every core
    tb = min(tb, B)
    if tb < B and C % 8:
        # keep the (tb*C, H*W) block's sublane extent a multiple of 8
        step = 8 // math.gcd(C, 8)
        tb = (tb // step) * step or B
    return int(tb)


def _pool_matrix(H, W, dtype):
    """(H*W, 5) matrix whose columns produce [global mean | TL | TR | BL | BR]
    adaptive-average-pool means (PyTorch floor/ceil bin boundaries, any H, W)."""
    hw = H * W
    rows = jnp.arange(hw, dtype=jnp.int32) // W
    cols = jnp.arange(hw, dtype=jnp.int32) % W

    def bins(n):  # 2-bin adaptive-pool boundaries: [floor(i*n/2), ceil((i+1)*n/2))
        return [((i * n) // 2, -((-(i + 1) * n) // 2)) for i in range(2)]

    mats = [jnp.full((hw,), 1.0 / hw, jnp.float32)]
    for rs, re in bins(H):
        for cs, ce in bins(W):
            m = (rows >= rs) & (rows < re) & (cols >= cs) & (cols < ce)
            mats.append(m.astype(jnp.float32) / float((re - rs) * (ce - cs)))
    return jnp.stack(mats, axis=1).astype(dtype)


# --------------------------------------------------------------------------- #
# Forward wrapper
# --------------------------------------------------------------------------- #
def spr_forward(x, w1, b1, w2, b2):
    """x: (B, C, H, W). w1: (hidden, 5C), b1: (hidden,), w2: (C, hidden), b2: (C,)
    -- the PyTorch 1x1-conv weights with the trailing 1x1 dims dropped.
    Returns the sigmoid attention weights with shape (B, C, 1, 1)."""
    B, C, H, W = x.shape
    HW = H * W
    hidden = w1.shape[0]
    assert hidden >= 1, "channels // reduction must be >= 1"

    # fc1 weight slabs, one per pooled feature, in the kernel's [g, TL, TR, BL, BR]
    # order.  PyTorch's fc1 input order is [global (C) | per-channel (TL,TR,BL,BR)].
    w1_glob = w1[:, :C]                                 # (hidden, C)
    w1_quad = w1[:, C:].reshape(hidden, C, 4)           # (hidden, C, 4)
    w1_slabs = jnp.stack([w1_glob] + [w1_quad[:, :, k] for k in range(4)], axis=0)
    w1_slabs = jnp.transpose(w1_slabs, (0, 2, 1)).astype(jnp.float32)  # (5, C, hidden)
    w2t = jnp.transpose(w2).astype(jnp.float32)          # (hidden, C)
    b1r = b1.reshape(1, hidden).astype(jnp.float32)
    b2r = b2.reshape(1, C).astype(jnp.float32)
    pool_mat = _pool_matrix(H, W, x.dtype)               # (HW, 5), x dtype

    x2 = x.reshape(B * C, HW)                            # contiguous -> free, lane-dense

    vmem_limit, x_budget, num_tc = _tpu_params()
    tb = _choose_batch_tile(B, C, HW, x.dtype.itemsize, x_budget, num_tc)
    grid = (pl.cdiv(B, tb),)                             # ragged tail handled by Pallas

    cost = pl.CostEstimate(
        flops=int(2 * B * C * HW * 5 + 2 * B * (5 * C * hidden + hidden * C)),
        transcendentals=int(B * C),
        bytes_accessed=int(
            x2.size * x2.dtype.itemsize
            + pool_mat.size * pool_mat.dtype.itemsize
            + (w1_slabs.size + w2t.size + b1r.size + b2r.size) * 4
            + B * C * x.dtype.itemsize
        ),
    )

    out = pl.pallas_call(
        spr_kernel,
        out_shape=jax.ShapeDtypeStruct((B, 1, C), x.dtype),
        grid=grid,
        in_specs=[
            pl.BlockSpec((tb * C, HW), lambda i: (i, 0)),
            pl.BlockSpec((HW, 5), lambda i: (0, 0)),
            pl.BlockSpec((5, C, hidden), lambda i: (0, 0, 0)),
            pl.BlockSpec((1, hidden), lambda i: (0, 0)),
            pl.BlockSpec((hidden, C), lambda i: (0, 0)),
            pl.BlockSpec((1, C), lambda i: (0, 0)),
        ],
        out_specs=pl.BlockSpec((tb, 1, C), lambda i: (i, 0, 0)),
        compiler_params=pltpu.CompilerParams(
            dimension_semantics=("parallel",),
            vmem_limit_bytes=vmem_limit,
        ),
        cost_estimate=cost,
    )(x2, pool_mat, w1_slabs, b1r, w2t, b2r)
    return out.reshape(B, C, 1, 1)


# --------------------------------------------------------------------------- #
# Pure-JAX reference (mirrors the PyTorch forward; even H, W)
# --------------------------------------------------------------------------- #
def spr_reference(x, w1, b1, w2, b2):
    B, C, H, W = x.shape
    p1 = jnp.mean(x, axis=(2, 3))                                    # (B, C)
    p2 = x.reshape(B, C, 2, H // 2, 2, W // 2).mean(axis=(3, 5))     # (B, C, 2, 2)
    p2 = p2.reshape(B, 4 * C)                                        # torch .view(B,-1)
    feat = jnp.concatenate([p1, p2], axis=1)                         # (B, 5C)
    h = jnp.maximum(feat @ w1.T + b1, 0.0)
    return jax.nn.sigmoid(h @ w2.T + b2).reshape(B, C, 1, 1)


if __name__ == "__main__":
    B, C, H, W = 2, 32, 16, 16
    reduction = 16
    hidden = C // reduction

    key = jax.random.PRNGKey(0)
    kx, k1, k2, k3, k4 = jax.random.split(key, 5)
    x = jax.random.normal(kx, (B, C, H, W), dtype=jnp.float32)

    # Deterministic synthetic parameters (Conv2d 1x1 weights, trailing 1x1 dropped)
    w1 = 0.1 * jax.random.normal(k1, (hidden, 5 * C), dtype=jnp.float32)
    b1 = 0.1 * jax.random.normal(k2, (hidden,), dtype=jnp.float32)
    w2 = 0.1 * jax.random.normal(k3, (C, hidden), dtype=jnp.float32)
    b2 = 0.1 * jax.random.normal(k4, (C,), dtype=jnp.float32)

    out = jax.block_until_ready(spr_forward(x, w1, b1, w2, b2))
    ref = spr_reference(x, w1, b1, w2, b2)

    assert out.shape == (B, C, 1, 1)
    # Tolerance accommodates MXU multi-pass f32 rounding / reassociation in the
    # pooling contraction; structural errors would be orders of magnitude larger.
    err = float(jnp.max(jnp.abs(out - ref)))
    assert jnp.allclose(out, ref, atol=5e-4, rtol=5e-4), err

    print("KERNEL_OK")
</pallas_src>

<mosaic_0001>
module attributes {stable_mosaic.version = 11 : i64} {
  func.func @spr_kernel(%arg0: i32, %arg1: memref<64x256xf32, #tpu.memory_space<vmem>>, %arg2: memref<256x5xf32, #tpu.memory_space<vmem>>, %arg3: memref<5x32x2xf32, #tpu.memory_space<vmem>>, %arg4: memref<1x2xf32, #tpu.memory_space<vmem>>, %arg5: memref<2x32xf32, #tpu.memory_space<vmem>>, %arg6: memref<1x32xf32, #tpu.memory_space<vmem>>, %arg7: memref<2x1x32xf32, #tpu.memory_space<vmem>>) attributes {dimension_semantics = [#tpu.dimension_semantics<parallel>], iteration_bounds = array<i64: 1>, scalar_prefetch = 0 : i64, scratch_operands = 0 : i64, tpu.core_type = #tpu.core_type<tc>, window_params = [{transform_indices = @transform_0, window_bounds = array<i64: 64, 256>}, {pipeline_mode = #tpu.pipeline_mode<synchronous>, transform_indices = @transform_1, window_bounds = array<i64: 256, 5>}, {pipeline_mode = #tpu.pipeline_mode<synchronous>, transform_indices = @transform_2, window_bounds = array<i64: 5, 32, 2>}, {pipeline_mode = #tpu.pipeline_mode<synchronous>, transform_indices = @transform_3, window_bounds = array<i64: 1, 2>}, {pipeline_mode = #tpu.pipeline_mode<synchronous>, transform_indices = @transform_4, window_bounds = array<i64: 2, 32>}, {pipeline_mode = #tpu.pipeline_mode<synchronous>, transform_indices = @transform_5, window_bounds = array<i64: 1, 32>}, {transform_indices = @transform_6, window_bounds = array<i64: 2, 1, 32>}]} {
    %c0 = arith.constant 0 : index
    %c0_0 = arith.constant 0 : index
    %0 = vector.load %arg1[%c0, %c0_0] : memref<64x256xf32, #tpu.memory_space<vmem>>, vector<64x256xf32>
    %c0_1 = arith.constant 0 : index
    %c0_2 = arith.constant 0 : index
    %1 = vector.load %arg2[%c0_1, %c0_2] : memref<256x5xf32, #tpu.memory_space<vmem>>, vector<256x5xf32>
    %cst = arith.constant dense<0.000000e+00> : vector<64x5xf32>
    %2 = tpu.matmul %0, %1, %cst {dimension_numbers = #tpu.dot_dimension_numbers<[1], [0], [0], [1], [0, 0, 1, 1], [], []>} : vector<64x256xf32>, vector<256x5xf32>, vector<64x5xf32> -> vector<64x5xf32>
    %3 = vector.shape_cast %2 : vector<64x5xf32> to vector<2x32x5xf32>
    %4 = tpu.iota {dimensions = array<i32: 2>} : vector<1x1x5xi32>
    %c0_3 = arith.constant 0 : index
    %c0_4 = arith.constant 0 : index
    %5 = vector.load %arg4[%c0_3, %c0_4] : memref<1x2xf32, #tpu.memory_space<vmem>>, vector<1x2xf32>
    %c0_i32 = arith.constant 0 : i32
    %6 = vector.broadcast %c0_i32 : i32 to vector<1x1x5xi32>
    %7 = arith.cmpi eq, %4, %6 : vector<1x1x5xi32>
    %cst_5 = arith.constant 0.000000e+00 : f32
    %8 = vector.shape_cast %7 : vector<1x1x5xi1> to vector<1x1x5xi1>
    %9 = vector.broadcast %8 : vector<1x1x5xi1> to vector<2x32x5xi1>
    %10 = vector.broadcast %cst_5 : f32 to vector<2x32x5xf32>
    %11 = arith.select %9, %3, %10 : vector<2x32x5xi1>, vector<2x32x5xf32>
    %cst_6 = arith.constant dense<0.000000e+00> : vector<2x32xf32>
    %12 = vector.multi_reduction <add>, %11, %cst_6 [2] : vector<2x32x5xf32> to vector<2x32xf32>
    %c0_7 = arith.constant 0 : index
    %c0_8 = arith.constant 0 : index
    %c0_9 = arith.constant 0 : index
    %13 = vector.load %arg3[%c0_7, %c0_8, %c0_9] : memref<5x32x2xf32, #tpu.memory_space<vmem>>, vector<1x32x2xf32>
    %14 = vector.shape_cast %13 : vector<1x32x2xf32> to vector<32x2xf32>
    %cst_10 = arith.constant dense<0.000000e+00> : vector<2x2xf32>
    %15 = tpu.matmul %12, %14, %cst_10 {dimension_numbers = #tpu.dot_dimension_numbers<[1], [0], [0], [1], [0, 0, 1, 1], [], []>} : vector<2x32xf32>, vector<32x2xf32>, vector<2x2xf32> -> vector<2x2xf32>
    %16 = vector.broadcast %5 : vector<1x2xf32> to vector<2x2xf32>
    %17 = arith.addf %16, %15 : vector<2x2xf32>
    %c1_i32 = arith.constant 1 : i32
    %18 = vector.broadcast %c1_i32 : i32 to vector<1x1x5xi32>
    %19 = arith.cmpi eq, %4, %18 : vector<1x1x5xi32>
    %cst_11 = arith.constant 0.000000e+00 : f32
    %20 = vector.shape_cast %19 : vector<1x1x5xi1> to vector<1x1x5xi1>
    %21 = vector.broadcast %20 : vector<1x1x5xi1> to vector<2x32x5xi1>
    %22 = vector.broadcast %cst_11 : f32 to vector<2x32x5xf32>
    %23 = arith.select %21, %3, %22 : vector<2x32x5xi1>, vector<2x32x5xf32>
    %cst_12 = arith.constant dense<0.000000e+00> : vector<2x32xf32>
    %24 = vector.multi_reduction <add>, %23, %cst_12 [2] : vector<2x32x5xf32> to vector<2x32xf32>
    %c1 = arith.constant 1 : index
    %c0_13 = arith.constant 0 : index
    %c0_14 = arith.constant 0 : index
    %25 = vector.load %arg3[%c1, %c0_13, %c0_14] : memref<5x32x2xf32, #tpu.memory_space<vmem>>, vector<1x32x2xf32>
    %26 = vector.shape_cast %25 : vector<1x32x2xf32> to vector<32x2xf32>
    %cst_15 = arith.constant dense<0.000000e+00> : vector<2x2xf32>
    %27 = tpu.matmul %24, %26, %cst_15 {dimension_numbers = #tpu.dot_dimension_numbers<[1], [0], [0], [1], [0, 0, 1, 1], [], []>} : vector<2x32xf32>, vector<32x2xf32>, vector<2x2xf32> -> vector<2x2xf32>
    %28 = arith.addf %17, %27 : vector<2x2xf32>
    %c2_i32 = arith.constant 2 : i32
    %29 = vector.broadcast %c2_i32 : i32 to vector<1x1x5xi32>
    %30 = arith.cmpi eq, %4, %29 : vector<1x1x5xi32>
    %cst_16 = arith.constant 0.000000e+00 : f32
    %31 = vector.shape_cast %30 : vector<1x1x5xi1> to vector<1x1x5xi1>
    %32 = vector.broadcast %31 : vector<1x1x5xi1> to vector<2x32x5xi1>
    %33 = vector.broadcast %cst_16 : f32 to vector<2x32x5xf32>
    %34 = arith.select %32, %3, %33 : vector<2x32x5xi1>, vector<2x32x5xf32>
    %cst_17 = arith.constant dense<0.000000e+00> : vector<2x32xf32>
    %35 = vector.multi_reduction <add>, %34, %cst_17 [2] : vector<2x32x5xf32> to vector<2x32xf32>
    %c2 = arith.constant 2 : index
    %c0_18 = arith.constant 0 : index
    %c0_19 = arith.constant 0 : index
    %36 = vector.load %arg3[%c2, %c0_18, %c0_19] : memref<5x32x2xf32, #tpu.memory_space<vmem>>, vector<1x32x2xf32>
    %37 = vector.shape_cast %36 : vector<1x32x2xf32> to vector<32x2xf32>
    %cst_20 = arith.constant dense<0.000000e+00> : vector<2x2xf32>
    %38 = tpu.matmul %35, %37, %cst_20 {dimension_numbers = #tpu.dot_dimension_numbers<[1], [0], [0], [1], [0, 0, 1, 1], [], []>} : vector<2x32xf32>, vector<32x2xf32>, vector<2x2xf32> -> vector<2x2xf32>
    %39 = arith.addf %28, %38 : vector<2x2xf32>
    %c3_i32 = arith.constant 3 : i32
    %40 = vector.broadcast %c3_i32 : i32 to vector<1x1x5xi32>
    %41 = arith.cmpi eq, %4, %40 : vector<1x1x5xi32>
    %cst_21 = arith.constant 0.000000e+00 : f32
    %42 = vector.shape_cast %41 : vector<1x1x5xi1> to vector<1x1x5xi1>
    %43 = vector.broadcast %42 : vector<1x1x5xi1> to vector<2x32x5xi1>
    %44 = vector.broadcast %cst_21 : f32 to vector<2x32x5xf32>
    %45 = arith.select %43, %3, %44 : vector<2x32x5xi1>, vector<2x32x5xf32>
    %cst_22 = arith.constant dense<0.000000e+00> : vector<2x32xf32>
    %46 = vector.multi_reduction <add>, %45, %cst_22 [2] : vector<2x32x5xf32> to vector<2x32xf32>
    %c3 = arith.constant 3 : index
    %c0_23 = arith.constant 0 : index
    %c0_24 = arith.constant 0 : index
    %47 = vector.load %arg3[%c3, %c0_23, %c0_24] : memref<5x32x2xf32, #tpu.memory_space<vmem>>, vector<1x32x2xf32>
    %48 = vector.shape_cast %47 : vector<1x32x2xf32> to vector<32x2xf32>
    %cst_25 = arith.constant dense<0.000000e+00> : vector<2x2xf32>
    %49 = tpu.matmul %46, %48, %cst_25 {dimension_numbers = #tpu.dot_dimension_numbers<[1], [0], [0], [1], [0, 0, 1, 1], [], []>} : vector<2x32xf32>, vector<32x2xf32>, vector<2x2xf32> -> vector<2x2xf32>
    %50 = arith.addf %39, %49 : vector<2x2xf32>
    %c4_i32 = arith.constant 4 : i32
    %51 = vector.broadcast %c4_i32 : i32 to vector<1x1x5xi32>
    %52 = arith.cmpi eq, %4, %51 : vector<1x1x5xi32>
    %cst_26 = arith.constant 0.000000e+00 : f32
    %53 = vector.shape_cast %52 : vector<1x1x5xi1> to vector<1x1x5xi1>
    %54 = vector.broadcast %53 : vector<1x1x5xi1> to vector<2x32x5xi1>
    %55 = vector.broadcast %cst_26 : f32 to vector<2x32x5xf32>
    %56 = arith.select %54, %3, %55 : vector<2x32x5xi1>, vector<2x32x5xf32>
    %cst_27 = arith.constant dense<0.000000e+00> : vector<2x32xf32>
    %57 = vector.multi_reduction <add>, %56, %cst_27 [2] : vector<2x32x5xf32> to vector<2x32xf32>
    %c4 = arith.constant 4 : index
    %c0_28 = arith.constant 0 : index
    %c0_29 = arith.constant 0 : index
    %58 = vector.load %arg3[%c4, %c0_28, %c0_29] : memref<5x32x2xf32, #tpu.memory_space<vmem>>, vector<1x32x2xf32>
    %59 = vector.shape_cast %58 : vector<1x32x2xf32> to vector<32x2xf32>
    %cst_30 = arith.constant dense<0.000000e+00> : vector<2x2xf32>
    %60 = tpu.matmul %57, %59, %cst_30 {dimension_numbers = #tpu.dot_dimension_numbers<[1], [0], [0], [1], [0, 0, 1, 1], [], []>} : vector<2x32xf32>, vector<32x2xf32>, vector<2x2xf32> -> vector<2x2xf32>
    %61 = arith.addf %50, %60 : vector<2x2xf32>
    %cst_31 = arith.constant 0.000000e+00 : f32
    %62 = vector.broadcast %cst_31 : f32 to vector<2x2xf32>
    %63 = arith.maximumf %61, %62 : vector<2x2xf32>
    %c0_32 = arith.constant 0 : index
    %c0_33 = arith.constant 0 : index
    %64 = vector.load %arg5[%c0_32, %c0_33] : memref<2x32xf32, #tpu.memory_space<vmem>>, vector<2x32xf32>
    %cst_34 = arith.constant dense<0.000000e+00> : vector<2x32xf32>
    %65 = tpu.matmul %63, %64, %cst_34 {dimension_numbers = #tpu.dot_dimension_numbers<[1], [0], [0], [1], [0, 0, 1, 1], [], []>} : vector<2x2xf32>, vector<2x32xf32>, vector<2x32xf32> -> vector<2x32xf32>
    %c0_35 = arith.constant 0 : index
    %c0_36 = arith.constant 0 : index
    %66 = vector.load %arg6[%c0_35, %c0_36] : memref<1x32xf32, #tpu.memory_space<vmem>>, vector<1x32xf32>
    %67 = vector.broadcast %66 : vector<1x32xf32> to vector<2x32xf32>
    %68 = arith.addf %65, %67 : vector<2x32xf32>
    %69 = arith.negf %68 : vector<2x32xf32>
    %70 = math.exp %69 : vector<2x32xf32>
    %cst_37 = arith.constant 1.000000e+00 : f32
    %71 = vector.broadcast %cst_37 : f32 to vector<2x32xf32>
    %72 = arith.addf %71, %70 : vector<2x32xf32>
    %73 = arith.divf %71, %72 : vector<2x32xf32>
    %c0_38 = arith.constant 0 : index
    %c0_39 = arith.constant 0 : index
    %c0_40 = arith.constant 0 : index
    %74 = vector.load %arg7[%c0_38, %c0_39, %c0_40] : memref<2x1x32xf32, #tpu.memory_space<vmem>>, vector<2x1x32xf32>
    %75 = vector.shape_cast %74 : vector<2x1x32xf32> to vector<2x32xf32>
    %76 = vector.shape_cast %73 : vector<2x32xf32> to vector<2x1x32xf32>
    tpu.vector_store %arg7[%c0_38, %c0_39, %c0_40], %76 {strides = array<i32>} : memref<2x1x32xf32, #tpu.memory_space<vmem>>, vector<2x1x32xf32>,
    return
  }
  func.func @transform_0(%arg0: i32) -> (i32, i32) {
    %c0_i32 = arith.constant 0 : i32
    %c0_i32_0 = arith.constant 0 : i32
    return %arg0, %c0_i32 : i32, i32
  }
  func.func @transform_1(%arg0: i32) -> (i32, i32) {
    %c0_i32 = arith.constant 0 : i32
    %c0_i32_0 = arith.constant 0 : i32
    %c0_i32_1 = arith.constant 0 : i32
    return %c0_i32, %c0_i32_0 : i32, i32
  }
  func.func @transform_2(%arg0: i32) -> (i32, i32, i32) {
    %c0_i32 = arith.constant 0 : i32
    %c0_i32_0 = arith.constant 0 : i32
    %c0_i32_1 = arith.constant 0 : i32
    %c0_i32_2 = arith.constant 0 : i32
    return %c0_i32, %c0_i32_0, %c0_i32_1 : i32, i32, i32
  }
  func.func @transform_3(%arg0: i32) -> (i32, i32) {
    %c0_i32 = arith.constant 0 : i32
    %c0_i32_0 = arith.constant 0 : i32
    %c0_i32_1 = arith.constant 0 : i32
    return %c0_i32, %c0_i32_0 : i32, i32
  }
  func.func @transform_4(%arg0: i32) -> (i32, i32) {
    %c0_i32 = arith.constant 0 : i32
    %c0_i32_0 = arith.constant 0 : i32
    %c0_i32_1 = arith.constant 0 : i32
    return %c0_i32, %c0_i32_0 : i32, i32
  }
  func.func @transform_5(%arg0: i32) -> (i32, i32) {
    %c0_i32 = arith.constant 0 : i32
    %c0_i32_0 = arith.constant 0 : i32
    %c0_i32_1 = arith.constant 0 : i32
    return %c0_i32, %c0_i32_0 : i32, i32
  }
  func.func @transform_6(%arg0: i32) -> (i32, i32, i32) {
    %c0_i32 = arith.constant 0 : i32
    %c0_i32_0 = arith.constant 0 : i32
    %c0_i32_1 = arith.constant 0 : i32
    return %arg0, %c0_i32, %c0_i32_0 : i32, i32, i32
  }
}

</mosaic_0001>

<llo_original>
// kernel: tpu_custom_call.1
$region0: #{tpu_custom_call.1}
  #allocation0 [shape = 'u32[]', space=smem, size = 0x4, offset = 0x4, fixed_abs, tag = 'smem constant byte address 0x4 - core index']
  #allocation1 [shape = 'u32[144,128]{1,0:T(1,128)}', space=vmem, size = 0x12000, scoped, tag = 'internal scratch']
  %s0 = inlined_call_operand.vmem [shape: f32[64,256], index: 0, kind: input, shape index: {}]
  %s1 = inlined_call_operand.vmem [shape: f32[256,5], index: 1, kind: input, shape index: {}]
  %s2 = inlined_call_operand.vmem [shape: f32[5,32,2], index: 2, kind: input, shape index: {}]
  %s3 = inlined_call_operand.vmem [shape: f32[1,2], index: 3, kind: input, shape index: {}]
  %s4 = inlined_call_operand.vmem [shape: f32[2,32], index: 4, kind: input, shape index: {}]
  %s5 = inlined_call_operand.vmem [shape: f32[1,32], index: 5, kind: input, shape index: {}]
  %s6 = inlined_call_operand.hbm [shape: f32[2,1,32], index: 6, kind: output, shape index: {}]
  %s7 = sld [smem:[#allocation0]]
  $region34: #{tpu_custom_call.1} parent=0
    _
  %s9 = ssub.s32 1, %s7
  %s10 = scalar_select 0, %s9, %s7
  $region1: #{tpu_custom_call.1} parent=0
    #allocation2 [shape = 'u8[1024]{0}', space=vmem, size = 0x400, scoped, tag = 'output window, operand 0, single buffered']
    #allocation3 [shape = 's32[1]{0}', space=sflag, size = 0x4, scoped, tag = 'scoped memory for tpu_custom_call.1']
    %11 = vsyncpa [#allocation3], 0
    // Predicated region
    $region2: #{tpu_custom_call.1} parent=1 // pred_check
      _
    $region3: #{tpu_custom_call.1} parent=1 // pred_check_branch
      %13 = sbr.rel (0) target = $region5
    $region4: #{tpu_custom_call.1} parent=1 // pred_region
      _
    $region5: #{tpu_custom_call.1} parent=1 // pred_fallthru
      _
    // Predicated region
    $region6: #{tpu_custom_call.1} parent=1 // pred_check
      _
    $region7: #{tpu_custom_call.1} parent=1 // pred_check_branch
      %15 = sbr.rel (0) target = $region9
    $region8: #{tpu_custom_call.1} parent=1 // pred_region
      _
    $region9: #{tpu_custom_call.1} parent=1 // pred_fallthru
      _
    // Predicated region
    $region10: #{tpu_custom_call.1} parent=1 // pred_check
      _
    $region11: #{tpu_custom_call.1} parent=1 // pred_check_branch
      %17 = sbr.rel (0) target = $region13
    $region12: #{tpu_custom_call.1} parent=1 // pred_region
      _
    $region13: #{tpu_custom_call.1} parent=1 // pred_fallthru
      _
    // Predicated region
    $region14: #{tpu_custom_call.1} parent=1 // pred_check
      _
    $region15: #{tpu_custom_call.1} parent=1 // pred_check_branch
      %19 = sbr.rel (0) target = $region17
    $region16: #{tpu_custom_call.1} parent=1 // pred_region
      _
    $region17: #{tpu_custom_call.1} parent=1 // pred_fallthru
      _
    // Predicated region
    $region18: #{tpu_custom_call.1} parent=1 // pred_check
      _
    $region19: #{tpu_custom_call.1} parent=1 // pred_check_branch
      %21 = sbr.rel (0) target = $region21
    $region20: #{tpu_custom_call.1} parent=1 // pred_region
      _
    $region21: #{tpu_custom_call.1} parent=1 // pred_fallthru
      _
    // Predicated region
    $region22: #{tpu_custom_call.1} parent=1 // pred_check
      _
    $region23: #{tpu_custom_call.1} parent=1 // pred_check_branch
      %23 = sbr.rel (0) target = $region25
    $region24: #{tpu_custom_call.1} parent=1 // pred_region
      _
    $region25: #{tpu_custom_call.1} parent=1 // pred_fallthru
      _
    %v24 = vld [vmem:[%s0] sm:$0xff]
    %v25 = vld [vmem:[%s0 + $0x8] sm:$0xff]
    %v26 = vld [vmem:[%s0 + $0x10] sm:$0xff]
    %v27 = vld [vmem:[%s0 + $0x18] sm:$0xff]
    %v28 = vld [vmem:[%s0 + $0x20] sm:$0xff]
    %v29 = vld [vmem:[%s0 + $0x28] sm:$0xff]
    %v30 = vld [vmem:[%s0 + $0x30] sm:$0xff]
    %v31 = vld [vmem:[%s0 + $0x38] sm:$0xff]
    %v32 = vld [vmem:[%s0 + $0x40] sm:$0xff]
    %v33 = vld [vmem:[%s0 + $0x48] sm:$0xff]
    %v34 = vld [vmem:[%s0 + $0x50] sm:$0xff]
    %v35 = vld [vmem:[%s0 + $0x58] sm:$0xff]
    %v36 = vld [vmem:[%s0 + $0x60] sm:$0xff]
    %v37 = vld [vmem:[%s0 + $0x68] sm:$0xff]
    %v38 = vld [vmem:[%s0 + $0x70] sm:$0xff]
    %v39 = vld [vmem:[%s0 + $0x78] sm:$0xff]
    %v40 = vld [vmem:[%s1] sm:$0xff]
    %v41 = vld [vmem:[%s1 + $0x8] sm:$0xff]
    %v42 = vld [vmem:[%s1 + $0x10] sm:$0xff]
    %v43 = vld [vmem:[%s1 + $0x18] sm:$0xff]
    %v44 = vld [vmem:[%s1 + $0x20] sm:$0xff]
    %v45 = vld [vmem:[%s1 + $0x28] sm:$0xff]
    %v46 = vld [vmem:[%s1 + $0x30] sm:$0xff]
    %v47 = vld [vmem:[%s1 + $0x38] sm:$0xff]
    %v48 = vld [vmem:[%s1 + $0x40] sm:$0xff]
    %v49 = vld [vmem:[%s1 + $0x48] sm:$0xff]
    %v50 = vld [vmem:[%s1 + $0x50] sm:$0xff]
    %v51 = vld [vmem:[%s1 + $0x58] sm:$0xff]
    %v52 = vld [vmem:[%s1 + $0x60] sm:$0xff]
    %v53 = vld [vmem:[%s1 + $0x68] sm:$0xff]
    %v54 = vld [vmem:[%s1 + $0x70] sm:$0xff]
    %v55 = vld [vmem:[%s1 + $0x78] sm:$0xff]
    %v56 = vld [vmem:[%s1 + $0x80] sm:$0xff]
    %v57 = vld [vmem:[%s1 + $0x88] sm:$0xff]
    %v58 = vld [vmem:[%s1 + $0x90] sm:$0xff]
    %v59 = vld [vmem:[%s1 + $0x98] sm:$0xff]
    %v60 = vld [vmem:[%s1 + $0xa0] sm:$0xff]
    %v61 = vld [vmem:[%s1 + $0xa8] sm:$0xff]
    %v62 = vld [vmem:[%s1 + $0xb0] sm:$0xff]
    %v63 = vld [vmem:[%s1 + $0xb8] sm:$0xff]
    %v64 = vld [vmem:[%s1 + $0xc0] sm:$0xff]
    %v65 = vld [vmem:[%s1 + $0xc8] sm:$0xff]
    %v66 = vld [vmem:[%s1 + $0xd0] sm:$0xff]
    %v67 = vld [vmem:[%s1 + $0xd8] sm:$0xff]
    %v68 = vld [vmem:[%s1 + $0xe0] sm:$0xff]
    %v69 = vld [vmem:[%s1 + $0xe8] sm:$0xff]
    %v70 = vld [vmem:[%s1 + $0xf0] sm:$0xff]
    %v71 = vld [vmem:[%s1 + $0xf8] sm:$0xff]
    %72 = vmatprep.subr.mxu0 0.0
    %73 = vmatpush1.msra.mxu0 %v55
    %74 = vmatprep.subr.mxu0 0.0
    %75 = vmatpush1.msra.mxu0 %v54
    %76 = vmatprep.subr.mxu0 0.0
    %77 = vmatpush1.msra.mxu0 %v53
    %78 = vmatprep.subr.mxu0 0.0
    %79 = vmatpush1.msra.mxu0 %v52
    %80 = vmatprep.subr.mxu0 0.0
    %81 = vmatpush1.msra.mxu0 %v51
    %82 = vmatprep.subr.mxu0 0.0
    %83 = vmatpush1.msra.mxu0 %v50
    %84 = vmatprep.subr.mxu0 0.0
    %85 = vmatpush1.msra.mxu0 %v49
    %86 = vmatprep.subr.mxu0 0.0
    %87 = vmatpush1.msra.mxu0 %v48
    %88 = vmatprep.subr.mxu0 0.0
    %89 = vmatpush1.msra.mxu0 %v47
    %90 = vmatprep.subr.mxu0 0.0
    %91 = vmatpush1.msra.mxu0 %v46
    %92 = vmatprep.subr.mxu0 0.0
    %93 = vmatpush1.msra.mxu0 %v45
    %94 = vmatprep.subr.mxu0 0.0
    %95 = vmatpush1.msra.mxu0 %v44
    %96 = vmatprep.subr.mxu0 0.0
    %97 = vmatpush1.msra.mxu0 %v43
    %98 = vmatprep.subr.mxu0 0.0
    %99 = vmatpush1.msra.mxu0 %v42
    %100 = vmatprep.subr.mxu0 0.0
    %101 = vmatpush1.msra.mxu0 %v41
    %102 = vmatprep.subr.mxu0 0.0
    %103 = vmatpush1.msra.mxu0 %v40
    %104 = vmatprep.subr.mxu0 0.0
    %105 = vmatpush2.msra.mxu0 %v71
    %106 = vmatprep.subr.mxu0 0.0
    %107 = vmatpush2.msra.mxu0 %v70
    %108 = vmatprep.subr.mxu0 0.0
    %109 = vmatpush2.msra.mxu0 %v69
    %110 = vmatprep.subr.mxu0 0.0
    %111 = vmatpush2.msra.mxu0 %v68
    %112 = vmatprep.subr.mxu0 0.0
    %113 = vmatpush2.msra.mxu0 %v67
    %114 = vmatprep.subr.mxu0 0.0
    %115 = vmatpush2.msra.mxu0 %v66
    %116 = vmatprep.subr.mxu0 0.0
    %117 = vmatpush2.msra.mxu0 %v65
    %118 = vmatprep.subr.mxu0 0.0
    %119 = vmatpush2.msra.mxu0 %v64
    %120 = vmatprep.subr.mxu0 0.0
    %121 = vmatpush2.msra.mxu0 %v63
    %122 = vmatprep.subr.mxu0 0.0
    %123 = vmatpush2.msra.mxu0 %v62
    %124 = vmatprep.subr.mxu0 0.0
    %125 = vmatpush2.msra.mxu0 %v61
    %126 = vmatprep.subr.mxu0 0.0
    %127 = vmatpush2.msra.mxu0 %v60
    %128 = vmatprep.subr.mxu0 0.0
    %129 = vmatpush2.msra.mxu0 %v59
    %130 = vmatprep.subr.mxu0 0.0
    %131 = vmatpush2.msra.mxu0 %v58
    %132 = vmatprep.subr.mxu0 0.0
    %133 = vmatpush2.msra.mxu0 %v57
    %134 = vmatprep.subr.mxu0 0.0
    %135 = vmatpush2.msra.mxu0 %v56
    %136 = vmatprep.mubr.f32.mxu0 %v25
    %137 = vmatmul.mubr.f32.gmra.mxu0 %v24
    %v138 = vpop.f32.mrf.mxu0
    %v139 = vadd.f32 0.0, %v138
    %v140 = vpop.f32.mrf.mxu0
    %141 = vmatprep.mubr.f32.mxu0 %v27
    %142 = vmatmul.mubr.f32.gmra.mxu0 %v26
    %v143 = vpop.f32.mrf.mxu0
    %v144 = vadd.f32 0.0, %v143
    %v145 = vpop.f32.mrf.mxu0
    %146 = vmatprep.mubr.f32.mxu0 %v29
    %147 = vmatmul.mubr.f32.gmra.mxu0 %v28
    %v148 = vpop.f32.mrf.mxu0
    %v149 = vadd.f32 0.0, %v148
    %v150 = vpop.f32.mrf.mxu0
    %151 = vmatprep.mubr.f32.mxu0 %v31
    %152 = vmatmul.mubr.f32.gmra.mxu0 %v30
    %v153 = vpop.f32.mrf.mxu0
    %v154 = vadd.f32 0.0, %v153
    %v155 = vpop.f32.mrf.mxu0
    %156 = vmatprep.mubr.f32.mxu0 %v33
    %157 = vmatmul.mubr.f32.gmra.mxu0 %v32
    %v158 = vpop.f32.mrf.mxu0
    %v159 = vadd.f32 0.0, %v158
    %v160 = vpop.f32.mrf.mxu0
    %161 = vmatprep.mubr.f32.mxu0 %v35
    %162 = vmatmul.mubr.f32.gmra.mxu0 %v34
    %v163 = vpop.f32.mrf.mxu0
    %v164 = vadd.f32 0.0, %v163
    %v165 = vpop.f32.mrf.mxu0
    %166 = vmatprep.mubr.f32.mxu0 %v37
    %167 = vmatmul.mubr.f32.gmra.mxu0 %v36
    %v168 = vpop.f32.mrf.mxu0
    %v169 = vadd.f32 0.0, %v168
    %v170 = vpop.f32.mrf.mxu0
    %171 = vmatprep.mubr.f32.mxu0 %v39
    %172 = vmatmul.mubr.f32.gmra.mxu0 %v38
    %v173 = vpop.f32.mrf.mxu0
    %v174 = vadd.f32 0.0, %v173
    %v175 = vpop.f32.mrf.mxu0
    %176 = vdwg.mxu0
    %v177 = vlaneseq
    %v178 = vand.u32 %v177, 127
    %v179 = vld [vmem:[%s3] sm:$0x1]
    %vm180 = vcmp.eq.s32.totalorder %v178, 0
    %v181 = vsel %vm180, 1, 0
    %vm182 = vcmp.eq.s32.totalorder %v181, 1
    %v183 = vsel %vm182, %v139, 0.0
    %v184 = vsel %vm182, %v144, 0.0
    %v185 = vsel %vm182, %v149, 0.0
    %v186 = vsel %vm182, %v154, 0.0
    %v187 = vsel %vm182, %v159, 0.0
    %v188 = vsel %vm182, %v164, 0.0
    %v189 = vsel %vm182, %v169, 0.0
    %v190 = vsel %vm182, %v174, 0.0
    %vm191 = vcmask 39936
    %v192 = vsel %vm191, %v183, 0.0
    %193 = vadd.xlane.f32.xlu0 %v192
    %v194 = vpop.xlane.xlu0 %193
    %v195 = vsel %vm191, %v184, 0.0
    %196 = vadd.xlane.f32.xlu0 %v195
    %v197 = vpop.xlane.xlu0 %196
    %v198 = vsel %vm191, %v185, 0.0
    %199 = vadd.xlane.f32.xlu0 %v198
    %v200 = vpop.xlane.xlu0 %199
    %v201 = vsel %vm191, %v186, 0.0
    %202 = vadd.xlane.f32.xlu0 %v201
    %v203 = vpop.xlane.xlu0 %202
    %v204 = vsel %vm191, %v187, 0.0
    %205 = vadd.xlane.f32.xlu0 %v204
    %v206 = vpop.xlane.xlu0 %205
    %v207 = vsel %vm191, %v188, 0.0
    %208 = vadd.xlane.f32.xlu0 %v207
    %v209 = vpop.xlane.xlu0 %208
    %v210 = vsel %vm191, %v189, 0.0
    %211 = vadd.xlane.f32.xlu0 %v210
    %v212 = vpop.xlane.xlu0 %211
    %v213 = vsel %vm191, %v190, 0.0
    %214 = vadd.xlane.f32.xlu0 %v213
    %v215 = vpop.xlane.xlu0 %214
    %v216 = vld [vmem:[%s2] sm:$0xff]
    %v217 = vld [vmem:[%s2 + $0x8] sm:$0xff]
    %v218 = vld [vmem:[%s2 + $0x10] sm:$0xff]
    %v219 = vld [vmem:[%s2 + $0x18] sm:$0xff]
    %v228 = vlaneseq
    %v229 = vshrl.u32 %v228, 7
    %v230 = vsub.s32 %v178, %v229
    %v231 = vrot.slane %v194, %v230
    %v232 = vadd.s32 %v178, 4294967288
    %v233 = vlaneseq
    %v234 = vshrl.u32 %v233, 7
    %v235 = vsub.s32 %v232, %v234
    %v236 = vrot.slane %v197, %v235
    %vm237 = vcmask 130112
    %v238 = vsel %vm237, %v236, %v231
    %v239 = vadd.s32 %v178, 4294967280
    %v240 = vlaneseq
    %v241 = vshrl.u32 %v240, 7
    %v242 = vsub.s32 %v239, %v241
    %v243 = vrot.slane %v200, %v242
    %vm244 = vcmask 195712
    %v245 = vsel %vm244, %v243, %v238
    %v246 = vadd.s32 %v178, 4294967272
    %v247 = vlaneseq
    %v248 = vshrl.u32 %v247, 7
    %v249 = vsub.s32 %v246, %v248
    %v250 = vrot.slane %v203, %v249
    %vm251 = vcmask 261312
    %v252 = vsel %vm251, %v250, %v245
    %v253 = vlaneseq
    %v254 = vshrl.u32 %v253, 7
    %v255 = vsub.s32 %v178, %v254
    %v256 = vrot.slane %v206, %v255
    %v257 = vlaneseq
    %v258 = vshrl.u32 %v257, 7
    %v259 = vsub.s32 %v232, %v258
    %v260 = vrot.slane %v209, %v259
    %v261 = vsel %vm237, %v260, %v256
    %v262 = vlaneseq
    %v263 = vshrl.u32 %v262, 7
    %v264 = vsub.s32 %v239, %v263
    %v265 = vrot.slane %v212, %v264
    %v266 = vsel %vm244, %v265, %v261
    %v267 = vlaneseq
    %v268 = vshrl.u32 %v267, 7
    %v269 = vsub.s32 %v246, %v268
    %v270 = vrot.slane %v215, %v269
    %v271 = vsel %vm251, %v270, %v266
    %vm272 = vcmask 1041409
    %v273 = vsel %vm272, %v271, %v252
    %vm274 = vcmask 261120
    %v275 = vsel %vm274, %v273, 0
    %277 = vmatprep.subr.mxu0 0.0
    %278 = vmatpush1.msra.mxu0 0.0
    %279 = vmatprep.subr.mxu0 0.0
    %280 = vmatpush1.msra.mxu0 0.0
    %281 = vmatprep.subr.mxu0 0.0
    %282 = vmatpush1.msra.mxu0 0.0
    %283 = vmatprep.subr.mxu0 0.0
    %284 = vmatpush1.msra.mxu0 0.0
    %285 = vmatprep.subr.mxu0 0.0
    %286 = vmatpush1.msra.mxu0 0.0
    %287 = vmatprep.subr.mxu0 0.0
    %288 = vmatpush1.msra.mxu0 0.0
    %289 = vmatprep.subr.mxu0 0.0
    %290 = vmatpush1.msra.mxu0 0.0
    %291 = vmatprep.subr.mxu0 0.0
    %292 = vmatpush1.msra.mxu0 0.0
    %293 = vmatprep.subr.mxu0 0.0
    %294 = vmatpush1.msra.mxu0 0.0
    %295 = vmatprep.subr.mxu0 0.0
    %296 = vmatpush1.msra.mxu0 0.0
    %297 = vmatprep.subr.mxu0 0.0
    %298 = vmatpush1.msra.mxu0 0.0
    %299 = vmatprep.subr.mxu0 0.0
    %300 = vmatpush1.msra.mxu0 0.0
    %301 = vmatprep.subr.mxu0 0.0
    %302 = vmatpush1.msra.mxu0 %v219
    %303 = vmatprep.subr.mxu0 0.0
    %304 = vmatpush1.msra.mxu0 %v218
    %305 = vmatprep.subr.mxu0 0.0
    %306 = vmatpush1.msra.mxu0 %v217
    %307 = vmatprep.subr.mxu0 0.0
    %308 = vmatpush1.msra.mxu0 %v216
    %309 = vmatprep.subr.mxu0 0.0
    %310 = vmatpush2.msra.mxu0 0.0
    %311 = vmatprep.subr.mxu0 0.0
    %312 = vmatpush2.msra.mxu0 0.0
    %313 = vmatprep.subr.mxu0 0.0
    %314 = vmatpush2.msra.mxu0 0.0
    %315 = vmatprep.subr.mxu0 0.0
    %316 = vmatpush2.msra.mxu0 0.0
    %317 = vmatprep.subr.mxu0 0.0
    %318 = vmatpush2.msra.mxu0 0.0
    %319 = vmatprep.subr.mxu0 0.0
    %320 = vmatpush2.msra.mxu0 0.0
    %321 = vmatprep.subr.mxu0 0.0
    %322 = vmatpush2.msra.mxu0 0.0
    %323 = vmatprep.subr.mxu0 0.0
    %324 = vmatpush2.msra.mxu0 0.0
    %325 = vmatprep.subr.mxu0 0.0
    %326 = vmatpush2.msra.mxu0 0.0
    %327 = vmatprep.subr.mxu0 0.0
    %328 = vmatpush2.msra.mxu0 0.0
    %329 = vmatprep.subr.mxu0 0.0
    %330 = vmatpush2.msra.mxu0 0.0
    %331 = vmatprep.subr.mxu0 0.0
    %332 = vmatpush2.msra.mxu0 0.0
    %333 = vmatprep.subr.mxu0 0.0
    %334 = vmatpush2.msra.mxu0 0.0
    %335 = vmatprep.subr.mxu0 0.0
    %336 = vmatpush2.msra.mxu0 0.0
    %337 = vmatprep.subr.mxu0 0.0
    %338 = vmatpush2.msra.mxu0 0.0
    %339 = vmatprep.subr.mxu0 0.0
    %340 = vmatpush2.msra.mxu0 0.0
    %341 = vmatprep.mubr.f32.mxu0 0.0
    %342 = vmatmul.mubr.f32.gmra.mxu0 %v275
    %v343 = vpop.f32.mrf.mxu0
    %v344 = vadd.f32 0.0, %v343
    %v345 = vpop.f32.mrf.mxu0
    %346 = vdwg.mxu0
    %v348 = vlaneseq
    %v349 = vshrl.u32 %v348, 7
    %v350 = vsub.s32 0, %v349
    %v351 = vrot.slane %v179, %v350
    %v353 = vadd.f32 %v351, %v344
    %vm354 = vcmp.eq.s32.totalorder %v178, 1
    %v355 = vsel %vm354, 1, 0
    %vm356 = vcmp.eq.s32.totalorder %v355, 1
    %v357 = vsel %vm356, %v139, 0.0
    %v358 = vsel %vm356, %v144, 0.0
    %v359 = vsel %vm356, %v149, 0.0
    %v360 = vsel %vm356, %v154, 0.0
    %v361 = vsel %vm356, %v159, 0.0
    %v362 = vsel %vm356, %v164, 0.0
    %v363 = vsel %vm356, %v169, 0.0
    %v364 = vsel %vm356, %v174, 0.0
    %v365 = vsel %vm191, %v357, 0.0
    %366 = vadd.xlane.f32.xlu0 %v365
    %v367 = vpop.xlane.xlu0 %366
    %v368 = vsel %vm191, %v358, 0.0
    %369 = vadd.xlane.f32.xlu0 %v368
    %v370 = vpop.xlane.xlu0 %369
    %v371 = vsel %vm191, %v359, 0.0
    %372 = vadd.xlane.f32.xlu0 %v371
    %v373 = vpop.xlane.xlu0 %372
    %v374 = vsel %vm191, %v360, 0.0
    %375 = vadd.xlane.f32.xlu0 %v374
    %v376 = vpop.xlane.xlu0 %375
    %v377 = vsel %vm191, %v361, 0.0
    %378 = vadd.xlane.f32.xlu0 %v377
    %v379 = vpop.xlane.xlu0 %378
    %v380 = vsel %vm191, %v362, 0.0
    %381 = vadd.xlane.f32.xlu0 %v380
    %v382 = vpop.xlane.xlu0 %381
    %v383 = vsel %vm191, %v363, 0.0
    %384 = vadd.xlane.f32.xlu0 %v383
    %v385 = vpop.xlane.xlu0 %384
    %v386 = vsel %vm191, %v364, 0.0
    %387 = vadd.xlane.f32.xlu0 %v386
    %v388 = vpop.xlane.xlu0 %387
    %s389 = scalar_lea.vmem %s2, 32
    %v390 = vld [vmem:[%s389] sm:$0xff]
    %v391 = vld [vmem:[%s389 + $0x8] sm:$0xff]
    %v392 = vld [vmem:[%s389 + $0x10] sm:$0xff]
    %v393 = vld [vmem:[%s389 + $0x18] sm:$0xff]
    %v402 = vlaneseq
    %v403 = vshrl.u32 %v402, 7
    %v404 = vsub.s32 %v178, %v403
    %v405 = vrot.slane %v367, %v404
    %v406 = vlaneseq
    %v407 = vshrl.u32 %v406, 7
    %v408 = vsub.s32 %v232, %v407
    %v409 = vrot.slane %v370, %v408
    %v410 = vsel %vm237, %v409, %v405
    %v411 = vlaneseq
    %v412 = vshrl.u32 %v411, 7
    %v413 = vsub.s32 %v239, %v412
    %v414 = vrot.slane %v373, %v413
    %v415 = vsel %vm244, %v414, %v410
    %v416 = vlaneseq
    %v417 = vshrl.u32 %v416, 7
    %v418 = vsub.s32 %v246, %v417
    %v419 = vrot.slane %v376, %v418
    %v420 = vsel %vm251, %v419, %v415
    %v421 = vlaneseq
    %v422 = vshrl.u32 %v421, 7
    %v423 = vsub.s32 %v178, %v422
    %v424 = vrot.slane %v379, %v423
    %v425 = vlaneseq
    %v426 = vshrl.u32 %v425, 7
    %v427 = vsub.s32 %v232, %v426
    %v428 = vrot.slane %v382, %v427
    %v429 = vsel %vm237, %v428, %v424
    %v430 = vlaneseq
    %v431 = vshrl.u32 %v430, 7
    %v432 = vsub.s32 %v239, %v431
    %v433 = vrot.slane %v385, %v432
    %v434 = vsel %vm244, %v433, %v429
    %v435 = vlaneseq
    %v436 = vshrl.u32 %v435, 7
    %v437 = vsub.s32 %v246, %v436
    %v438 = vrot.slane %v388, %v437
    %v439 = vsel %vm251, %v438, %v434
    %v440 = vsel %vm272, %v439, %v420
    %v441 = vsel %vm274, %v440, 0
    %443 = vmatprep.subr.mxu0 0.0
    %444 = vmatpush1.msra.mxu0 0.0
    %445 = vmatprep.subr.mxu0 0.0
    %446 = vmatpush1.msra.mxu0 0.0
    %447 = vmatprep.subr.mxu0 0.0
    %448 = vmatpush1.msra.mxu0 0.0
    %449 = vmatprep.subr.mxu0 0.0
    %450 = vmatpush1.msra.mxu0 0.0
    %451 = vmatprep.subr.mxu0 0.0
    %452 = vmatpush1.msra.mxu0 0.0
    %453 = vmatprep.subr.mxu0 0.0
    %454 = vmatpush1.msra.mxu0 0.0
    %455 = vmatprep.subr.mxu0 0.0
    %456 = vmatpush1.msra.mxu0 0.0
    %457 = vmatprep.subr.mxu0 0.0
    %458 = vmatpush1.msra.mxu0 0.0
    %459 = vmatprep.subr.mxu0 0.0
    %460 = vmatpush1.msra.mxu0 0.0
    %461 = vmatprep.subr.mxu0 0.0
    %462 = vmatpush1.msra.mxu0 0.0
    %463 = vmatprep.subr.mxu0 0.0
    %464 = vmatpush1.msra.mxu0 0.0
    %465 = vmatprep.subr.mxu0 0.0
    %466 = vmatpush1.msra.mxu0 0.0
    %467 = vmatprep.subr.mxu0 0.0
    %468 = vmatpush1.msra.mxu0 %v393
    %469 = vmatprep.subr.mxu0 0.0
    %470 = vmatpush1.msra.mxu0 %v392
    %471 = vmatprep.subr.mxu0 0.0
    %472 = vmatpush1.msra.mxu0 %v391
    %473 = vmatprep.subr.mxu0 0.0
    %474 = vmatpush1.msra.mxu0 %v390
    %475 = vmatprep.subr.mxu0 0.0
    %476 = vmatpush2.msra.mxu0 0.0
    %477 = vmatprep.subr.mxu0 0.0
    %478 = vmatpush2.msra.mxu0 0.0
    %479 = vmatprep.subr.mxu0 0.0
    %480 = vmatpush2.msra.mxu0 0.0
    %481 = vmatprep.subr.mxu0 0.0
    %482 = vmatpush2.msra.mxu0 0.0
    %483 = vmatprep.subr.mxu0 0.0
    %484 = vmatpush2.msra.mxu0 0.0
    %485 = vmatprep.subr.mxu0 0.0
    %486 = vmatpush2.msra.mxu0 0.0
    %487 = vmatprep.subr.mxu0 0.0
    %488 = vmatpush2.msra.mxu0 0.0
    %489 = vmatprep.subr.mxu0 0.0
    %490 = vmatpush2.msra.mxu0 0.0
    %491 = vmatprep.subr.mxu0 0.0
    %492 = vmatpush2.msra.mxu0 0.0
    %493 = vmatprep.subr.mxu0 0.0
    %494 = vmatpush2.msra.mxu0 0.0
    %495 = vmatprep.subr.mxu0 0.0
    %496 = vmatpush2.msra.mxu0 0.0
    %497 = vmatprep.subr.mxu0 0.0
    %498 = vmatpush2.msra.mxu0 0.0
    %499 = vmatprep.subr.mxu0 0.0
    %500 = vmatpush2.msra.mxu0 0.0
    %501 = vmatprep.subr.mxu0 0.0
    %502 = vmatpush2.msra.mxu0 0.0
    %503 = vmatprep.subr.mxu0 0.0
    %504 = vmatpush2.msra.mxu0 0.0
    %505 = vmatprep.subr.mxu0 0.0
    %506 = vmatpush2.msra.mxu0 0.0
    %507 = vmatprep.mubr.f32.mxu0 0.0
    %508 = vmatmul.mubr.f32.gmra.mxu0 %v441
    %v509 = vpop.f32.mrf.mxu0
    %v510 = vadd.f32 0.0, %v509
    %v511 = vpop.f32.mrf.mxu0
    %512 = vdwg.mxu0
    %v513 = vadd.f32 %v353, %v510
    %vm514 = vcmp.eq.s32.totalorder %v178, 2
    %v515 = vsel %vm514, 1, 0
    %vm516 = vcmp.eq.s32.totalorder %v515, 1
    %v517 = vsel %vm516, %v139, 0.0
    %v518 = vsel %vm516, %v144, 0.0
    %v519 = vsel %vm516, %v149, 0.0
    %v520 = vsel %vm516, %v154, 0.0
    %v521 = vsel %vm516, %v159, 0.0
    %v522 = vsel %vm516, %v164, 0.0
    %v523 = vsel %vm516, %v169, 0.0
    %v524 = vsel %vm516, %v174, 0.0
    %v525 = vsel %vm191, %v517, 0.0
    %526 = vadd.xlane.f32.xlu0 %v525
    %v527 = vpop.xlane.xlu0 %526
    %v528 = vsel %vm191, %v518, 0.0
    %529 = vadd.xlane.f32.xlu0 %v528
    %v530 = vpop.xlane.xlu0 %529
    %v531 = vsel %vm191, %v519, 0.0
    %532 = vadd.xlane.f32.xlu0 %v531
    %v533 = vpop.xlane.xlu0 %532
    %v534 = vsel %vm191, %v520, 0.0
    %535 = vadd.xlane.f32.xlu0 %v534
    %v536 = vpop.xlane.xlu0 %535
    %v537 = vsel %vm191, %v521, 0.0
    %538 = vadd.xlane.f32.xlu0 %v537
    %v539 = vpop.xlane.xlu0 %538
    %v540 = vsel %vm191, %v522, 0.0
    %541 = vadd.xlane.f32.xlu0 %v540
    %v542 = vpop.xlane.xlu0 %541
    %v543 = vsel %vm191, %v523, 0.0
    %544 = vadd.xlane.f32.xlu0 %v543
    %v545 = vpop.xlane.xlu0 %544
    %v546 = vsel %vm191, %v524, 0.0
    %547 = vadd.xlane.f32.xlu0 %v546
    %v548 = vpop.xlane.xlu0 %547
    %s549 = scalar_lea.vmem %s2, 64
    %v550 = vld [vmem:[%s549] sm:$0xff]
    %v551 = vld [vmem:[%s549 + $0x8] sm:$0xff]
    %v552 = vld [vmem:[%s549 + $0x10] sm:$0xff]
    %v553 = vld [vmem:[%s549 + $0x18] sm:$0xff]
    %v562 = vlaneseq
    %v563 = vshrl.u32 %v562, 7
    %v564 = vsub.s32 %v178, %v563
    %v565 = vrot.slane %v527, %v564
    %v566 = vlaneseq
    %v567 = vshrl.u32 %v566, 7
    %v568 = vsub.s32 %v232, %v567
    %v569 = vrot.slane %v530, %v568
    %v570 = vsel %vm237, %v569, %v565
    %v571 = vlaneseq
    %v572 = vshrl.u32 %v571, 7
    %v573 = vsub.s32 %v239, %v572
    %v574 = vrot.slane %v533, %v573
    %v575 = vsel %vm244, %v574, %v570
    %v576 = vlaneseq
    %v577 = vshrl.u32 %v576, 7
    %v578 = vsub.s32 %v246, %v577
    %v579 = vrot.slane %v536, %v578
    %v580 = vsel %vm251, %v579, %v575
    %v581 = vlaneseq
    %v582 = vshrl.u32 %v581, 7
    %v583 = vsub.s32 %v178, %v582
    %v584 = vrot.slane %v539, %v583
    %v585 = vlaneseq
    %v586 = vshrl.u32 %v585, 7
    %v587 = vsub.s32 %v232, %v586
    %v588 = vrot.slane %v542, %v587
    %v589 = vsel %vm237, %v588, %v584
    %v590 = vlaneseq
    %v591 = vshrl.u32 %v590, 7
    %v592 = vsub.s32 %v239, %v591
    %v593 = vrot.slane %v545, %v592
    %v594 = vsel %vm244, %v593, %v589
    %v595 = vlaneseq
    %v596 = vshrl.u32 %v595, 7
    %v597 = vsub.s32 %v246, %v596
    %v598 = vrot.slane %v548, %v597
    %v599 = vsel %vm251, %v598, %v594
    %v600 = vsel %vm272, %v599, %v580
    %v601 = vsel %vm274, %v600, 0
    %603 = vmatprep.subr.mxu0 0.0
    %604 = vmatpush1.msra.mxu0 0.0
    %605 = vmatprep.subr.mxu0 0.0
    %606 = vmatpush1.msra.mxu0 0.0
    %607 = vmatprep.subr.mxu0 0.0
    %608 = vmatpush1.msra.mxu0 0.0
    %609 = vmatprep.subr.mxu0 0.0
    %610 = vmatpush1.msra.mxu0 0.0
    %611 = vmatprep.subr.mxu0 0.0
    %612 = vmatpush1.msra.mxu0 0.0
    %613 = vmatprep.subr.mxu0 0.0
    %614 = vmatpush1.msra.mxu0 0.0
    %615 = vmatprep.subr.mxu0 0.0
    %616 = vmatpush1.msra.mxu0 0.0
    %617 = vmatprep.subr.mxu0 0.0
    %618 = vmatpush1.msra.mxu0 0.0
    %619 = vmatprep.subr.mxu0 0.0
    %620 = vmatpush1.msra.mxu0 0.0
    %621 = vmatprep.subr.mxu0 0.0
    %622 = vmatpush1.msra.mxu0 0.0
    %623 = vmatprep.subr.mxu0 0.0
    %624 = vmatpush1.msra.mxu0 0.0
    %625 = vmatprep.subr.mxu0 0.0
    %626 = vmatpush1.msra.mxu0 0.0
    %627 = vmatprep.subr.mxu0 0.0
    %628 = vmatpush1.msra.mxu0 %v553
    %629 = vmatprep.subr.mxu0 0.0
    %630 = vmatpush1.msra.mxu0 %v552
    %631 = vmatprep.subr.mxu0 0.0
    %632 = vmatpush1.msra.mxu0 %v551
    %633 = vmatprep.subr.mxu0 0.0
    %634 = vmatpush1.msra.mxu0 %v550
    %635 = vmatprep.subr.mxu0 0.0
    %636 = vmatpush2.msra.mxu0 0.0
    %637 = vmatprep.subr.mxu0 0.0
    %638 = vmatpush2.msra.mxu0 0.0
    %639 = vmatprep.subr.mxu0 0.0
    %640 = vmatpush2.msra.mxu0 0.0
    %641 = vmatprep.subr.mxu0 0.0
    %642 = vmatpush2.msra.mxu0 0.0
    %643 = vmatprep.subr.mxu0 0.0
    %644 = vmatpush2.msra.mxu0 0.0
    %645 = vmatprep.subr.mxu0 0.0
    %646 = vmatpush2.msra.mxu0 0.0
    %647 = vmatprep.subr.mxu0 0.0
    %648 = vmatpush2.msra.mxu0 0.0
    %649 = vmatprep.subr.mxu0 0.0
    %650 = vmatpush2.msra.mxu0 0.0
    %651 = vmatprep.subr.mxu0 0.0
    %652 = vmatpush2.msra.mxu0 0.0
    %653 = vmatprep.subr.mxu0 0.0
    %654 = vmatpush2.msra.mxu0 0.0
    %655 = vmatprep.subr.mxu0 0.0
    %656 = vmatpush2.msra.mxu0 0.0
    %657 = vmatprep.subr.mxu0 0.0
    %658 = vmatpush2.msra.mxu0 0.0
    %659 = vmatprep.subr.mxu0 0.0
    %660 = vmatpush2.msra.mxu0 0.0
    %661 = vmatprep.subr.mxu0 0.0
    %662 = vmatpush2.msra.mxu0 0.0
    %663 = vmatprep.subr.mxu0 0.0
    %664 = vmatpush2.msra.mxu0 0.0
    %665 = vmatprep.subr.mxu0 0.0
    %666 = vmatpush2.msra.mxu0 0.0
    %667 = vmatprep.mubr.f32.mxu0 0.0
    %668 = vmatmul.mubr.f32.gmra.mxu0 %v601
    %v669 = vpop.f32.mrf.mxu0
    %v670 = vadd.f32 0.0, %v669
    %v671 = vpop.f32.mrf.mxu0
    %672 = vdwg.mxu0
    %v673 = vadd.f32 %v513, %v670
    %vm674 = vcmp.eq.s32.totalorder %v178, 3
    %v675 = vsel %vm674, 1, 0
    %vm676 = vcmp.eq.s32.totalorder %v675, 1
    %v677 = vsel %vm676, %v139, 0.0
    %v678 = vsel %vm676, %v144, 0.0
    %v679 = vsel %vm676, %v149, 0.0
    %v680 = vsel %vm676, %v154, 0.0
    %v681 = vsel %vm676, %v159, 0.0
    %v682 = vsel %vm676, %v164, 0.0
    %v683 = vsel %vm676, %v169, 0.0
    %v684 = vsel %vm676, %v174, 0.0
    %v685 = vsel %vm191, %v677, 0.0
    %686 = vadd.xlane.f32.xlu0 %v685
    %v687 = vpop.xlane.xlu0 %686
    %v688 = vsel %vm191, %v678, 0.0
    %689 = vadd.xlane.f32.xlu0 %v688
    %v690 = vpop.xlane.xlu0 %689
    %v691 = vsel %vm191, %v679, 0.0
    %692 = vadd.xlane.f32.xlu0 %v691
    %v693 = vpop.xlane.xlu0 %692
    %v694 = vsel %vm191, %v680, 0.0
    %695 = vadd.xlane.f32.xlu0 %v694
    %v696 = vpop.xlane.xlu0 %695
    %v697 = vsel %vm191, %v681, 0.0
    %698 = vadd.xlane.f32.xlu0 %v697
    %v699 = vpop.xlane.xlu0 %698
    %v700 = vsel %vm191, %v682, 0.0
    %701 = vadd.xlane.f32.xlu0 %v700
    %v702 = vpop.xlane.xlu0 %701
    %v703 = vsel %vm191, %v683, 0.0
    %704 = vadd.xlane.f32.xlu0 %v703
    %v705 = vpop.xlane.xlu0 %704
    %v706 = vsel %vm191, %v684, 0.0
    %707 = vadd.xlane.f32.xlu0 %v706
    %v708 = vpop.xlane.xlu0 %707
    %s709 = scalar_lea.vmem %s2, 96
    %v710 = vld [vmem:[%s709] sm:$0xff]
    %v711 = vld [vmem:[%s709 + $0x8] sm:$0xff]
    %v712 = vld [vmem:[%s709 + $0x10] sm:$0xff]
    %v713 = vld [vmem:[%s709 + $0x18] sm:$0xff]
    %v722 = vlaneseq
    %v723 = vshrl.u32 %v722, 7
    %v724 = vsub.s32 %v178, %v723
    %v725 = vrot.slane %v687, %v724
    %v726 = vlaneseq
    %v727 = vshrl.u32 %v726, 7
    %v728 = vsub.s32 %v232, %v727
    %v729 = vrot.slane %v690, %v728
    %v730 = vsel %vm237, %v729, %v725
    %v731 = vlaneseq
    %v732 = vshrl.u32 %v731, 7
    %v733 = vsub.s32 %v239, %v732
    %v734 = vrot.slane %v693, %v733
    %v735 = vsel %vm244, %v734, %v730
    %v736 = vlaneseq
    %v737 = vshrl.u32 %v736, 7
    %v738 = vsub.s32 %v246, %v737
    %v739 = vrot.slane %v696, %v738
    %v740 = vsel %vm251, %v739, %v735
    %v741 = vlaneseq
    %v742 = vshrl.u32 %v741, 7
    %v743 = vsub.s32 %v178, %v742
    %v744 = vrot.slane %v699, %v743
    %v745 = vlaneseq
    %v746 = vshrl.u32 %v745, 7
    %v747 = vsub.s32 %v232, %v746
    %v748 = vrot.slane %v702, %v747
    %v749 = vsel %vm237, %v748, %v744
    %v750 = vlaneseq
    %v751 = vshrl.u32 %v750, 7
    %v752 = vsub.s32 %v239, %v751
    %v753 = vrot.slane %v705, %v752
    %v754 = vsel %vm244, %v753, %v749
    %v755 = vlaneseq
    %v756 = vshrl.u32 %v755, 7
    %v757 = vsub.s32 %v246, %v756
    %v758 = vrot.slane %v708, %v757
    %v759 = vsel %vm251, %v758, %v754
    %v760 = vsel %vm272, %v759, %v740
    %v761 = vsel %vm274, %v760, 0
    %763 = vmatprep.subr.mxu0 0.0
    %764 = vmatpush1.msra.mxu0 0.0
    %765 = vmatprep.subr.mxu0 0.0
    %766 = vmatpush1.msra.mxu0 0.0
    %767 = vmatprep.subr.mxu0 0.0
    %768 = vmatpush1.msra.mxu0 0.0
    %769 = vmatprep.subr.mxu0 0.0
    %770 = vmatpush1.msra.mxu0 0.0
    %771 = vmatprep.subr.mxu0 0.0
    %772 = vmatpush1.msra.mxu0 0.0
    %773 = vmatprep.subr.mxu0 0.0
    %774 = vmatpush1.msra.mxu0 0.0
    %775 = vmatprep.subr.mxu0 0.0
    %776 = vmatpush1.msra.mxu0 0.0
    %777 = vmatprep.subr.mxu0 0.0
    %778 = vmatpush1.msra.mxu0 0.0
    %779 = vmatprep.subr.mxu0 0.0
    %780 = vmatpush1.msra.mxu0 0.0
    %781 = vmatprep.subr.mxu0 0.0
    %782 = vmatpush1.msra.mxu0 0.0
    %783 = vmatprep.subr.mxu0 0.0
    %784 = vmatpush1.msra.mxu0 0.0
    %785 = vmatprep.subr.mxu0 0.0
    %786 = vmatpush1.msra.mxu0 0.0
    %787 = vmatprep.subr.mxu0 0.0
    %788 = vmatpush1.msra.mxu0 %v713
    %789 = vmatprep.subr.mxu0 0.0
    %790 = vmatpush1.msra.mxu0 %v712
    %791 = vmatprep.subr.mxu0 0.0
    %792 = vmatpush1.msra.mxu0 %v711
    %793 = vmatprep.subr.mxu0 0.0
    %794 = vmatpush1.msra.mxu0 %v710
    %795 = vmatprep.subr.mxu0 0.0
    %796 = vmatpush2.msra.mxu0 0.0
    %797 = vmatprep.subr.mxu0 0.0
    %798 = vmatpush2.msra.mxu0 0.0
    %799 = vmatprep.subr.mxu0 0.0
    %800 = vmatpush2.msra.mxu0 0.0
    %801 = vmatprep.subr.mxu0 0.0
    %802 = vmatpush2.msra.mxu0 0.0
    %803 = vmatprep.subr.mxu0 0.0
    %804 = vmatpush2.msra.mxu0 0.0
    %805 = vmatprep.subr.mxu0 0.0
    %806 = vmatpush2.msra.mxu0 0.0
    %807 = vmatprep.subr.mxu0 0.0
    %808 = vmatpush2.msra.mxu0 0.0
    %809 = vmatprep.subr.mxu0 0.0
    %810 = vmatpush2.msra.mxu0 0.0
    %811 = vmatprep.subr.mxu0 0.0
    %812 = vmatpush2.msra.mxu0 0.0
    %813 = vmatprep.subr.mxu0 0.0
    %814 = vmatpush2.msra.mxu0 0.0
    %815 = vmatprep.subr.mxu0 0.0
    %816 = vmatpush2.msra.mxu0 0.0
    %817 = vmatprep.subr.mxu0 0.0
    %818 = vmatpush2.msra.mxu0 0.0
    %819 = vmatprep.subr.mxu0 0.0
    %820 = vmatpush2.msra.mxu0 0.0
    %821 = vmatprep.subr.mxu0 0.0
    %822 = vmatpush2.msra.mxu0 0.0
    %823 = vmatprep.subr.mxu0 0.0
    %824 = vmatpush2.msra.mxu0 0.0
    %825 = vmatprep.subr.mxu0 0.0
    %826 = vmatpush2.msra.mxu0 0.0
    %827 = vmatprep.mubr.f32.mxu0 0.0
    %828 = vmatmul.mubr.f32.gmra.mxu0 %v761
    %v829 = vpop.f32.mrf.mxu0
    %v830 = vadd.f32 0.0, %v829
    %v831 = vpop.f32.mrf.mxu0
    %832 = vdwg.mxu0
    %v833 = vadd.f32 %v673, %v830
    %vm834 = vcmp.eq.s32.totalorder %v178, 4
    %v835 = vsel %vm834, 1, 0
    %vm836 = vcmp.eq.s32.totalorder %v835, 1
    %v837 = vsel %vm836, %v139, 0.0
    %v838 = vsel %vm836, %v144, 0.0
    %v839 = vsel %vm836, %v149, 0.0
    %v840 = vsel %vm836, %v154, 0.0
    %v841 = vsel %vm836, %v159, 0.0
    %v842 = vsel %vm836, %v164, 0.0
    %v843 = vsel %vm836, %v169, 0.0
    %v844 = vsel %vm836, %v174, 0.0
    %v845 = vsel %vm191, %v837, 0.0
    %846 = vadd.xlane.f32.xlu0 %v845
    %v847 = vpop.xlane.xlu0 %846
    %v848 = vsel %vm191, %v838, 0.0
    %849 = vadd.xlane.f32.xlu0 %v848
    %v850 = vpop.xlane.xlu0 %849
    %v851 = vsel %vm191, %v839, 0.0
    %852 = vadd.xlane.f32.xlu0 %v851
    %v853 = vpop.xlane.xlu0 %852
    %v854 = vsel %vm191, %v840, 0.0
    %855 = vadd.xlane.f32.xlu0 %v854
    %v856 = vpop.xlane.xlu0 %855
    %v857 = vsel %vm191, %v841, 0.0
    %858 = vadd.xlane.f32.xlu0 %v857
    %v859 = vpop.xlane.xlu0 %858
    %v860 = vsel %vm191, %v842, 0.0
    %861 = vadd.xlane.f32.xlu0 %v860
    %v862 = vpop.xlane.xlu0 %861
    %v863 = vsel %vm191, %v843, 0.0
    %864 = vadd.xlane.f32.xlu0 %v863
    %v865 = vpop.xlane.xlu0 %864
    %v866 = vsel %vm191, %v844, 0.0
    %867 = vadd.xlane.f32.xlu0 %v866
    %v868 = vpop.xlane.xlu0 %867
    %s869 = scalar_lea.vmem %s2, 128
    %v870 = vld [vmem:[%s869] sm:$0xff]
    %v871 = vld [vmem:[%s869 + $0x8] sm:$0xff]
    %v872 = vld [vmem:[%s869 + $0x10] sm:$0xff]
    %v873 = vld [vmem:[%s869 + $0x18] sm:$0xff]
    %v882 = vlaneseq
    %v883 = vshrl.u32 %v882, 7
    %v884 = vsub.s32 %v178, %v883
    %v885 = vrot.slane %v847, %v884
    %v886 = vlaneseq
    %v887 = vshrl.u32 %v886, 7
    %v888 = vsub.s32 %v232, %v887
    %v889 = vrot.slane %v850, %v888
    %v890 = vsel %vm237, %v889, %v885
    %v891 = vlaneseq
    %v892 = vshrl.u32 %v891, 7
    %v893 = vsub.s32 %v239, %v892
    %v894 = vrot.slane %v853, %v893
    %v895 = vsel %vm244, %v894, %v890
    %v896 = vlaneseq
    %v897 = vshrl.u32 %v896, 7
    %v898 = vsub.s32 %v246, %v897
    %v899 = vrot.slane %v856, %v898
    %v900 = vsel %vm251, %v899, %v895
    %v901 = vlaneseq
    %v902 = vshrl.u32 %v901, 7
    %v903 = vsub.s32 %v178, %v902
    %v904 = vrot.slane %v859, %v903
    %v905 = vlaneseq
    %v906 = vshrl.u32 %v905, 7
    %v907 = vsub.s32 %v232, %v906
    %v908 = vrot.slane %v862, %v907
    %v909 = vsel %vm237, %v908, %v904
    %v910 = vlaneseq
    %v911 = vshrl.u32 %v910, 7
    %v912 = vsub.s32 %v239, %v911
    %v913 = vrot.slane %v865, %v912
    %v914 = vsel %vm244, %v913, %v909
    %v915 = vlaneseq
    %v916 = vshrl.u32 %v915, 7
    %v917 = vsub.s32 %v246, %v916
    %v918 = vrot.slane %v868, %v917
    %v919 = vsel %vm251, %v918, %v914
    %v920 = vsel %vm272, %v919, %v900
    %v921 = vsel %vm274, %v920, 0
    %923 = vmatprep.subr.mxu0 0.0
    %924 = vmatpush1.msra.mxu0 0.0
    %925 = vmatprep.subr.mxu0 0.0
    %926 = vmatpush1.msra.mxu0 0.0
    %927 = vmatprep.subr.mxu0 0.0
    %928 = vmatpush1.msra.mxu0 0.0
    %929 = vmatprep.subr.mxu0 0.0
    %930 = vmatpush1.msra.mxu0 0.0
    %931 = vmatprep.subr.mxu0 0.0
    %932 = vmatpush1.msra.mxu0 0.0
    %933 = vmatprep.subr.mxu0 0.0
    %934 = vmatpush1.msra.mxu0 0.0
    %935 = vmatprep.subr.mxu0 0.0
    %936 = vmatpush1.msra.mxu0 0.0
    %937 = vmatprep.subr.mxu0 0.0
    %938 = vmatpush1.msra.mxu0 0.0
    %939 = vmatprep.subr.mxu0 0.0
    %940 = vmatpush1.msra.mxu0 0.0
    %941 = vmatprep.subr.mxu0 0.0
    %942 = vmatpush1.msra.mxu0 0.0
    %943 = vmatprep.subr.mxu0 0.0
    %944 = vmatpush1.msra.mxu0 0.0
    %945 = vmatprep.subr.mxu0 0.0
    %946 = vmatpush1.msra.mxu0 0.0
    %947 = vmatprep.subr.mxu0 0.0
    %948 = vmatpush1.msra.mxu0 %v873
    %949 = vmatprep.subr.mxu0 0.0
    %950 = vmatpush1.msra.mxu0 %v872
    %951 = vmatprep.subr.mxu0 0.0
    %952 = vmatpush1.msra.mxu0 %v871
    %953 = vmatprep.subr.mxu0 0.0
    %954 = vmatpush1.msra.mxu0 %v870
    %955 = vmatprep.subr.mxu0 0.0
    %956 = vmatpush2.msra.mxu0 0.0
    %957 = vmatprep.subr.mxu0 0.0
    %958 = vmatpush2.msra.mxu0 0.0
    %959 = vmatprep.subr.mxu0 0.0
    %960 = vmatpush2.msra.mxu0 0.0
    %961 = vmatprep.subr.mxu0 0.0
    %962 = vmatpush2.msra.mxu0 0.0
    %963 = vmatprep.subr.mxu0 0.0
    %964 = vmatpush2.msra.mxu0 0.0
    %965 = vmatprep.subr.mxu0 0.0
    %966 = vmatpush2.msra.mxu0 0.0
    %967 = vmatprep.subr.mxu0 0.0
    %968 = vmatpush2.msra.mxu0 0.0
    %969 = vmatprep.subr.mxu0 0.0
    %970 = vmatpush2.msra.mxu0 0.0
    %971 = vmatprep.subr.mxu0 0.0
    %972 = vmatpush2.msra.mxu0 0.0
    %973 = vmatprep.subr.mxu0 0.0
    %974 = vmatpush2.msra.mxu0 0.0
    %975 = vmatprep.subr.mxu0 0.0
    %976 = vmatpush2.msra.mxu0 0.0
    %977 = vmatprep.subr.mxu0 0.0
    %978 = vmatpush2.msra.mxu0 0.0
    %979 = vmatprep.subr.mxu0 0.0
    %980 = vmatpush2.msra.mxu0 0.0
    %981 = vmatprep.subr.mxu0 0.0
    %982 = vmatpush2.msra.mxu0 0.0
    %983 = vmatprep.subr.mxu0 0.0
    %984 = vmatpush2.msra.mxu0 0.0
    %985 = vmatprep.subr.mxu0 0.0
    %986 = vmatpush2.msra.mxu0 0.0
    %987 = vmatprep.mubr.f32.mxu0 0.0
    %988 = vmatmul.mubr.f32.gmra.mxu0 %v921
    %v989 = vpop.f32.mrf.mxu0
    %v990 = vadd.f32 0.0, %v989
    %v991 = vpop.f32.mrf.mxu0
    %992 = vdwg.mxu0
    %v993 = vadd.f32 %v833, %v990
    %v994 = vmax.f32 %v993, 0.0
    %v995 = vld [vmem:[%s4] sm:$0x3]
    %v996 = vld [vmem:[%s5] sm:$0x1]
    %v998 = vlaneseq
    %v999 = vshrl.u32 %v998, 7
    %v1000 = vsub.s32 0, %v999
    %v1001 = vrot.slane %v996, %v1000
    %vm1003 = vcmask 15360
    %v1005 = vsel %vm1003, %v994, 0
    %vm1007 = vcmask 1041408
    %v1009 = vsel %vm1007, %v995, 0
    %1011 = vmatprep.subr.mxu0 0.0
    %1012 = vmatpush1.msra.mxu0 0.0
    %1013 = vmatprep.subr.mxu0 0.0
    %1014 = vmatpush1.msra.mxu0 0.0
    %1015 = vmatprep.subr.mxu0 0.0
    %1016 = vmatpush1.msra.mxu0 0.0
    %1017 = vmatprep.subr.mxu0 0.0
    %1018 = vmatpush1.msra.mxu0 0.0
    %1019 = vmatprep.subr.mxu0 0.0
    %1020 = vmatpush1.msra.mxu0 0.0
    %1021 = vmatprep.subr.mxu0 0.0
    %1022 = vmatpush1.msra.mxu0 0.0
    %1023 = vmatprep.subr.mxu0 0.0
    %1024 = vmatpush1.msra.mxu0 0.0
    %1025 = vmatprep.subr.mxu0 0.0
    %1026 = vmatpush1.msra.mxu0 0.0
    %1027 = vmatprep.subr.mxu0 0.0
    %1028 = vmatpush1.msra.mxu0 0.0
    %1029 = vmatprep.subr.mxu0 0.0
    %1030 = vmatpush1.msra.mxu0 0.0
    %1031 = vmatprep.subr.mxu0 0.0
    %1032 = vmatpush1.msra.mxu0 0.0
    %1033 = vmatprep.subr.mxu0 0.0
    %1034 = vmatpush1.msra.mxu0 0.0
    %1035 = vmatprep.subr.mxu0 0.0
    %1036 = vmatpush1.msra.mxu0 0.0
    %1037 = vmatprep.subr.mxu0 0.0
    %1038 = vmatpush1.msra.mxu0 0.0
    %1039 = vmatprep.subr.mxu0 0.0
    %1040 = vmatpush1.msra.mxu0 0.0
    %1041 = vmatprep.subr.mxu0 0.0
    %1042 = vmatpush1.msra.mxu0 %v1009
    %1043 = vmatprep.subr.mxu0 0.0
    %1044 = vmatpush2.msra.mxu0 0.0
    %1045 = vmatprep.subr.mxu0 0.0
    %1046 = vmatpush2.msra.mxu0 0.0
    %1047 = vmatprep.subr.mxu0 0.0
    %1048 = vmatpush2.msra.mxu0 0.0
    %1049 = vmatprep.subr.mxu0 0.0
    %1050 = vmatpush2.msra.mxu0 0.0
    %1051 = vmatprep.subr.mxu0 0.0
    %1052 = vmatpush2.msra.mxu0 0.0
    %1053 = vmatprep.subr.mxu0 0.0
    %1054 = vmatpush2.msra.mxu0 0.0
    %1055 = vmatprep.subr.mxu0 0.0
    %1056 = vmatpush2.msra.mxu0 0.0
    %1057 = vmatprep.subr.mxu0 0.0
    %1058 = vmatpush2.msra.mxu0 0.0
    %1059 = vmatprep.subr.mxu0 0.0
    %1060 = vmatpush2.msra.mxu0 0.0
    %1061 = vmatprep.subr.mxu0 0.0
    %1062 = vmatpush2.msra.mxu0 0.0
    %1063 = vmatprep.subr.mxu0 0.0
    %1064 = vmatpush2.msra.mxu0 0.0
    %1065 = vmatprep.subr.mxu0 0.0
    %1066 = vmatpush2.msra.mxu0 0.0
    %1067 = vmatprep.subr.mxu0 0.0
    %1068 = vmatpush2.msra.mxu0 0.0
    %1069 = vmatprep.subr.mxu0 0.0
    %1070 = vmatpush2.msra.mxu0 0.0
    %1071 = vmatprep.subr.mxu0 0.0
    %1072 = vmatpush2.msra.mxu0 0.0
    %1073 = vmatprep.subr.mxu0 0.0
    %1074 = vmatpush2.msra.mxu0 0.0
    %1075 = vmatprep.mubr.f32.mxu0 0.0
    %1076 = vmatmul.mubr.f32.gmra.mxu0 %v1005
    %v1077 = vpop.f32.mrf.mxu0
    %v1078 = vadd.f32 %v1001, %v1077
    %v1079 = vpop.f32.mrf.mxu0
    %1080 = vdwg.mxu0
    %v1081 = vxor.u32 %v1078, 2147483648
    %v1082 = vmul.f32 %v1081, 1.442695
    %v1083 = vpow.pop %v1082
    %v1084 = vadd.f32 %v1083, 1.0
    %v1085 = vrcp.pop %v1084
    %v1086 = vmul.f32 1.0, %v1085
    %v1089 = vunpack.c.l.s4 1966171168
    %v1090 = vunpack.c.0.s8 %v1089
    %v1091 = vlaneseq
    %v1092 = vshrl.u32 %v1091, 7
    %v1093 = vsub.s32 %v1090, %v1092
    %v1094 = vrot.slane %v1086, %v1093
    %v1095 = vcombine.high %v1094, %v1094
    %v1097 = vunpack.c.l.s4 1966171168
    %v1098 = vunpack.c.0.s8 %v1097
    %v1099 = vlaneseq
    %v1100 = vshrl.u32 %v1099, 7
    %v1101 = vsub.s32 %v1098, %v1100
    %v1102 = vrot.slane %v1094, %v1101
    %v1104 = vunpack.c.l.s4 1966171168
    %v1105 = vunpack.c.0.s8 %v1104
    %v1106 = vlaneseq
    %v1107 = vshrl.u32 %v1106, 7
    %v1108 = vsub.s32 %v1105, %v1107
    %v1109 = vrot.slane %v1095, %v1108
    %vm1112 = vcmask 253952
    %1113 = vst.msk [vmem:[#allocation2] sm:$0x1] %vm1112, %v1102
    %1114 = vst.msk [vmem:[#allocation2 + $0x1] sm:$0x1] %vm1112, %v1109
    // Predicated region
    $region26: #{tpu_custom_call.1} parent=1 // pred_check
      _
    $region27: #{tpu_custom_call.1} parent=1 // pred_check_branch
      %1116 = sbr.rel (0) target = $region29
    $region28: #{tpu_custom_call.1} parent=1 // pred_region
      %s1118 = ssub.s32 32, 32
      %1119 = vsyncadd [#allocation3], %s1118
      %s1120 = sshll.u32 [#allocation2], 4
      %s1121 = int_to_ptr.vmem [resolvable:$true] %s1120
      %1126 = dma.vmem_to_hbm [thread:$0]  %s1121, 32, %s6, [#allocation3], 16, 16, 1
    $region29: #{tpu_custom_call.1} parent=1 // pred_fallthru
      _
    // Predicated region
    $region30: #{tpu_custom_call.1} parent=1 // pred_check
      _
    $region31: #{tpu_custom_call.1} parent=1 // pred_check_branch
      %1128 = sbr.rel (0) target = $region33
    $region32: #{tpu_custom_call.1} parent=1 // pred_region
      %1129 = dma.done [#allocation3], 32
    $region33: #{tpu_custom_call.1} parent=1 // pred_fallthru
      _
    %1130 = vsyncpa [#allocation3], 1

</llo_original>
